<compile_context>
chip_gen: v6e
topology: v6e:2x2x1
jax: 0.10.0
libtpu: 0.0.40
codegen_flags: <defaults>
</compile_context>

<pallas_src>
from functools import partial

import jax
import jax.numpy as jnp
from jax.experimental import pallas as pl
from jax.experimental.pallas import tpu as pltpu


def _round_up(x, m):
    return (x + m - 1) // m * m


def _fused_mlp2_kernel(x_ref, w1_ref, b1_ref, w2_ref, b2_ref,
                       o_pi_ref, o_vf_ref, *, dim_pi, dim_vf):
    """relu(relu(x @ W1 + b1) @ W2 + b2) for one batch tile, both heads fused.

    W1 = concat(pi_w1, vf_w1) along the output axis (128 lanes, lane-dense).
    W2 = block-diagonal (128, dim_pi + dim_vf) with pi_w2 / vf_w2 in disjoint blocks.
    Matmul operands are bf16 (or whatever dtype the weights carry), accumulation and
    all elementwise math are f32 (safe on v5e: no bf16 VALU there).
    """
    # Layer 1 (both branches): (tile, F) @ (F, 128) -> (tile, 128), f32 accumulate.
    x = x_ref[...].astype(w1_ref.dtype)
    h = jnp.dot(x, w1_ref[...], preferred_element_type=jnp.float32)
    h = jnp.maximum(h + b1_ref[...], 0.0)                      # f32 VPU math
    # Layer 2 (block-diagonal): (tile, 128) @ (128, dim_pi+dim_vf), f32 accumulate.
    y = jnp.dot(h.astype(w2_ref.dtype), w2_ref[...],
                preferred_element_type=jnp.float32)
    y = jnp.maximum(y + b2_ref[...], 0.0)                      # f32 VPU math
    # Exact-width stores: no padded columns ever reach HBM.
    o_pi_ref[...] = y[:, :dim_pi].astype(o_pi_ref.dtype)
    o_vf_ref[...] = y[:, dim_pi:dim_pi + dim_vf].astype(o_vf_ref.dtype)


def fused_dense2_relu(x, w1, b1, w2, b2, dim_pi, dim_vf, *, max_block_rows=2048):
    """Run the fused two-head MLP over the batch with a 1-D 'parallel' grid.

    x  : (B, F)  features (any float dtype; cast to the weight dtype for the MXU)
    w1 : (F, H)  b1: (1, H)   H = 128 (pi || vf hidden, lane-dense)
    w2 : (H, O)  b2: (1, O)   O = dim_pi + dim_vf (block-diagonal, exact width)
    Returns (pi: (B, dim_pi), vf: (B, dim_vf)) in x.dtype.
    """
    B, F = x.shape
    H = w1.shape[1]
    O = w2.shape[1]

    # Batch tile: multiple of 8 sublanes, large enough to amortize per-step grid
    # overhead, but capped at ~half the batch so the 'parallel' axis has >=2 steps
    # for v7x's two TensorCores whenever B > 8.
    half_cap = max(_round_up(-(-B // 2), 8), 8)
    tile = max(8, min(_round_up(B, 8), max_block_rows, half_cap))
    grid = pl.cdiv(B, tile)  # ragged last block: OOB reads are per-row garbage,
                             # OOB output writes are masked by Pallas.

    pi, vf = pl.pallas_call(
        partial(_fused_mlp2_kernel, dim_pi=dim_pi, dim_vf=dim_vf),
        out_shape=(jax.ShapeDtypeStruct((B, dim_pi), x.dtype),
                   jax.ShapeDtypeStruct((B, dim_vf), x.dtype)),
        grid=(grid,),
        in_specs=[
            pl.BlockSpec((tile, F), lambda i: (i, 0)),   # batch tile of features
            pl.BlockSpec((F, H), lambda i: (0, 0)),      # weights: constant index_map,
            pl.BlockSpec((1, H), lambda i: (0, 0)),      # VMEM-resident across steps
            pl.BlockSpec((H, O), lambda i: (0, 0)),
            pl.BlockSpec((1, O), lambda i: (0, 0)),
        ],
        out_specs=(pl.BlockSpec((tile, dim_pi), lambda i: (i, 0)),
                   pl.BlockSpec((tile, dim_vf), lambda i: (i, 0))),
        compiler_params=pltpu.CompilerParams(
            dimension_semantics=("parallel",)),
    )(x, w1, b1, w2, b2)
    return pi, vf


class CustomNetworkPallas:
    """JAX/Pallas port of CustomNetwork (default DenseLayer MLP branch).

    Both heads are evaluated by a single fused Pallas kernel. Per-branch f32
    parameters are kept for reference checking / external use; the fused bf16
    copies are rebuilt by _build_fused_params (call it again if params change).
    """

    HIDDEN = 64  # per-branch hidden width (as in the PyTorch module)

    def __init__(self, feature_dim, last_layer_dim_pi, last_layer_dim_vf,
                 key=jax.random.PRNGKey(0), dtype=jnp.float32,
                 compute_dtype=jnp.bfloat16):
        self.latent_dim_pi = last_layer_dim_pi
        self.latent_dim_vf = last_layer_dim_vf
        self.dtype = dtype
        self.compute_dtype = compute_dtype
        hidden = self.HIDDEN
        ks = jax.random.split(key, 8)

        def init_linear(k_w, k_b, fan_in, fan_out):
            # Deterministic init (Kaiming-uniform-ish scale, like nn.Linear default).
            bound = 1.0 / jnp.sqrt(jnp.asarray(fan_in, dtype))
            w = jax.random.uniform(k_w, (fan_in, fan_out), dtype, -bound, bound)
            b = jax.random.uniform(k_b, (1, fan_out), dtype, -bound, bound)
            return w, b

        # Per-branch parameters (PyTorch-equivalent layout: x @ W + b).
        self.pi_w1, self.pi_b1 = init_linear(ks[0], ks[1], feature_dim, hidden)
        self.pi_w2, self.pi_b2 = init_linear(ks[2], ks[3], hidden, last_layer_dim_pi)
        self.vf_w1, self.vf_b1 = init_linear(ks[4], ks[5], feature_dim, hidden)
        self.vf_w2, self.vf_b2 = init_linear(ks[6], ks[7], hidden, last_layer_dim_vf)

        self._build_fused_params()

    def _build_fused_params(self):
        """Build fused, lane-dense parameters (call again after any param update)."""
        hidden = self.HIDDEN
        dim_pi, dim_vf = self.latent_dim_pi, self.latent_dim_vf
        cdt = self.compute_dtype

        # Layer 1: concat along the output axis -> hidden of 2*64 = 128 lanes.
        h_cat = 2 * hidden
        w1 = jnp.concatenate([self.pi_w1, self.vf_w1], axis=1).astype(cdt)
        b1 = jnp.concatenate([self.pi_b1, self.vf_b1], axis=1).astype(jnp.float32)

        # Layer 2: block-diagonal, exact output width dim_pi + dim_vf (no lane pad:
        # the kernel stores exact-width outputs, so padded columns would only waste HBM).
        out_cat = dim_pi + dim_vf
        w2 = jnp.zeros((h_cat, out_cat), jnp.float32)
        w2 = w2.at[:hidden, :dim_pi].set(self.pi_w2.astype(jnp.float32))
        w2 = w2.at[hidden:h_cat, dim_pi:out_cat].set(self.vf_w2.astype(jnp.float32))
        b2 = jnp.zeros((1, out_cat), jnp.float32)
        b2 = b2.at[:, :dim_pi].set(self.pi_b2.astype(jnp.float32))
        b2 = b2.at[:, dim_pi:out_cat].set(self.vf_b2.astype(jnp.float32))

        self.fused_w1, self.fused_b1 = w1, b1
        self.fused_w2, self.fused_b2 = w2.astype(cdt), b2

    def _fused(self, features):
        return fused_dense2_relu(features, self.fused_w1, self.fused_b1,
                                 self.fused_w2, self.fused_b2,
                                 self.latent_dim_pi, self.latent_dim_vf)

    def forward(self, features):
        return self._fused(features)

    def forward_actor(self, features):
        return self._fused(features)[0]

    def forward_critic(self, features):
        return self._fused(features)[1]


if __name__ == "__main__":
    key = jax.random.PRNGKey(0)
    k_x, k_x2, k_params = jax.random.split(key, 3)

    batch = 8
    feature_dim = 32
    last_layer_dim_pi = 16
    last_layer_dim_vf = 16

    net = CustomNetworkPallas(feature_dim, last_layer_dim_pi, last_layer_dim_vf,
                              key=k_params)

    # Reference in plain JAX f32 (same math as the PyTorch module).
    def ref_branch(x, w1, b1, w2, b2):
        h = jnp.maximum(x @ w1 + b1, 0.0)
        return jnp.maximum(h @ w2 + b2, 0.0)

    # bf16 MXU operands with f32 accumulation -> loosened tolerances vs the f32 ref.
    ATOL = RTOL = 3e-2

    # --- Aligned batch ---
    features = jax.random.normal(k_x, (batch, feature_dim), jnp.float32)
    latent_pi, latent_vf = net.forward(features)
    latent_pi = jax.block_until_ready(latent_pi)
    latent_vf = jax.block_until_ready(latent_vf)

    ref_pi = ref_branch(features, net.pi_w1, net.pi_b1, net.pi_w2, net.pi_b2)
    ref_vf = ref_branch(features, net.vf_w1, net.vf_b1, net.vf_w2, net.vf_b2)

    assert latent_pi.shape == (batch, last_layer_dim_pi)
    assert latent_vf.shape == (batch, last_layer_dim_vf)
    assert jnp.allclose(latent_pi, ref_pi, atol=ATOL, rtol=RTOL)
    assert jnp.allclose(latent_vf, ref_vf, atol=ATOL, rtol=RTOL)

    # --- Unaligned batch (exercises the ragged last-block / masked-store path) ---
    features5 = jax.random.normal(k_x2, (5, feature_dim), jnp.float32)
    pi5, vf5 = net.forward(features5)
    pi5 = jax.block_until_ready(pi5)
    vf5 = jax.block_until_ready(vf5)
    assert pi5.shape == (5, last_layer_dim_pi)
    assert vf5.shape == (5, last_layer_dim_vf)
    assert jnp.allclose(pi5, ref_branch(features5, net.pi_w1, net.pi_b1,
                                        net.pi_w2, net.pi_b2), atol=ATOL, rtol=RTOL)
    assert jnp.allclose(vf5, ref_branch(features5, net.vf_w1, net.vf_b1,
                                        net.vf_w2, net.vf_b2), atol=ATOL, rtol=RTOL)

    # --- Larger batch (exercises >=2 grid steps / the 'parallel' axis) ---
    features_big = jax.random.normal(k_x, (300, feature_dim), jnp.float32)
    pib, vfb = net.forward(features_big)
    pib = jax.block_until_ready(pib)
    vfb = jax.block_until_ready(vfb)
    assert jnp.allclose(pib, ref_branch(features_big, net.pi_w1, net.pi_b1,
                                        net.pi_w2, net.pi_b2), atol=ATOL, rtol=RTOL)
    assert jnp.allclose(vfb, ref_branch(features_big, net.vf_w1, net.vf_b1,
                                        net.vf_w2, net.vf_b2), atol=ATOL, rtol=RTOL)

    print("KERNEL_OK")
</pallas_src>

<mosaic_0001>
module attributes {stable_mosaic.version = 11 : i64} {
  func.func @_fused_mlp2_kernel(%arg0: i32, %arg1: memref<8x32xf32, #tpu.memory_space<vmem>>, %arg2: memref<32x128xbf16, #tpu.memory_space<vmem>>, %arg3: memref<1x128xf32, #tpu.memory_space<vmem>>, %arg4: memref<128x32xbf16, #tpu.memory_space<vmem>>, %arg5: memref<1x32xf32, #tpu.memory_space<vmem>>, %arg6: memref<8x16xf32, #tpu.memory_space<vmem>>, %arg7: memref<8x16xf32, #tpu.memory_space<vmem>>) attributes {dimension_semantics = [#tpu.dimension_semantics<parallel>], iteration_bounds = array<i64: 1>, scalar_prefetch = 0 : i64, scratch_operands = 0 : i64, tpu.core_type = #tpu.core_type<tc>, window_params = [{transform_indices = @transform_0, window_bounds = array<i64: 8, 32>}, {pipeline_mode = #tpu.pipeline_mode<synchronous>, transform_indices = @transform_1, window_bounds = array<i64: 32, 128>}, {pipeline_mode = #tpu.pipeline_mode<synchronous>, transform_indices = @transform_2, window_bounds = array<i64: 1, 128>}, {pipeline_mode = #tpu.pipeline_mode<synchronous>, transform_indices = @transform_3, window_bounds = array<i64: 128, 32>}, {pipeline_mode = #tpu.pipeline_mode<synchronous>, transform_indices = @transform_4, window_bounds = array<i64: 1, 32>}, {transform_indices = @transform_5, window_bounds = array<i64: 8, 16>}, {transform_indices = @transform_6, window_bounds = array<i64: 8, 16>}]} {
    %c0 = arith.constant 0 : index
    %c0_0 = arith.constant 0 : index
    %0 = vector.load %arg1[%c0, %c0_0] : memref<8x32xf32, #tpu.memory_space<vmem>>, vector<8x32xf32>
    %1 = arith.truncf %0 : vector<8x32xf32> to vector<8x32xbf16>
    %c0_1 = arith.constant 0 : index
    %c0_2 = arith.constant 0 : index
    %2 = vector.load %arg2[%c0_1, %c0_2] : memref<32x128xbf16, #tpu.memory_space<vmem>>, vector<32x128xbf16>
    %cst = arith.constant dense<0.000000e+00> : vector<8x128xf32>
    %3 = tpu.matmul %1, %2, %cst {dimension_numbers = #tpu.dot_dimension_numbers<[1], [0], [0], [1], [0, 0, 1, 1], [], []>} : vector<8x32xbf16>, vector<32x128xbf16>, vector<8x128xf32> -> vector<8x128xf32>
    %c0_3 = arith.constant 0 : index
    %c0_4 = arith.constant 0 : index
    %4 = vector.load %arg3[%c0_3, %c0_4] : memref<1x128xf32, #tpu.memory_space<vmem>>, vector<1x128xf32>
    %5 = vector.broadcast %4 : vector<1x128xf32> to vector<8x128xf32>
    %6 = arith.addf %3, %5 : vector<8x128xf32>
    %cst_5 = arith.constant 0.000000e+00 : f32
    %7 = vector.broadcast %cst_5 : f32 to vector<8x128xf32>
    %8 = arith.maximumf %6, %7 : vector<8x128xf32>
    %9 = arith.truncf %8 : vector<8x128xf32> to vector<8x128xbf16>
    %c0_6 = arith.constant 0 : index
    %c0_7 = arith.constant 0 : index
    %10 = vector.load %arg4[%c0_6, %c0_7] : memref<128x32xbf16, #tpu.memory_space<vmem>>, vector<128x32xbf16>
    %cst_8 = arith.constant dense<0.000000e+00> : vector<8x32xf32>
    %11 = tpu.matmul %9, %10, %cst_8 {dimension_numbers = #tpu.dot_dimension_numbers<[1], [0], [0], [1], [0, 0, 1, 1], [], []>} : vector<8x128xbf16>, vector<128x32xbf16>, vector<8x32xf32> -> vector<8x32xf32>
    %c0_9 = arith.constant 0 : index
    %c0_10 = arith.constant 0 : index
    %12 = vector.load %arg5[%c0_9, %c0_10] : memref<1x32xf32, #tpu.memory_space<vmem>>, vector<1x32xf32>
    %13 = vector.broadcast %12 : vector<1x32xf32> to vector<8x32xf32>
    %14 = arith.addf %11, %13 : vector<8x32xf32>
    %cst_11 = arith.constant 0.000000e+00 : f32
    %15 = vector.broadcast %cst_11 : f32 to vector<8x32xf32>
    %16 = arith.maximumf %14, %15 : vector<8x32xf32>
    %17 = vector.extract_strided_slice %16 {offsets = [0, 0], sizes = [8, 16], strides = [1, 1]} : vector<8x32xf32> to vector<8x16xf32>
    %c0_12 = arith.constant 0 : index
    %c0_13 = arith.constant 0 : index
    %18 = vector.load %arg6[%c0_12, %c0_13] : memref<8x16xf32, #tpu.memory_space<vmem>>, vector<8x16xf32>
    tpu.vector_store %arg6[%c0_12, %c0_13], %17 {strides = array<i32>} : memref<8x16xf32, #tpu.memory_space<vmem>>, vector<8x16xf32>,
    %19 = vector.extract_strided_slice %16 {offsets = [0, 16], sizes = [8, 16], strides = [1, 1]} : vector<8x32xf32> to vector<8x16xf32>
    %c0_14 = arith.constant 0 : index
    %c0_15 = arith.constant 0 : index
    %20 = vector.load %arg7[%c0_14, %c0_15] : memref<8x16xf32, #tpu.memory_space<vmem>>, vector<8x16xf32>
    tpu.vector_store %arg7[%c0_14, %c0_15], %19 {strides = array<i32>} : memref<8x16xf32, #tpu.memory_space<vmem>>, vector<8x16xf32>,
    return
  }
  func.func @transform_0(%arg0: i32) -> (i32, i32) {
    %c0_i32 = arith.constant 0 : i32
    %c0_i32_0 = arith.constant 0 : i32
    return %arg0, %c0_i32 : i32, i32
  }
  func.func @transform_1(%arg0: i32) -> (i32, i32) {
    %c0_i32 = arith.constant 0 : i32
    %c0_i32_0 = arith.constant 0 : i32
    %c0_i32_1 = arith.constant 0 : i32
    return %c0_i32, %c0_i32_0 : i32, i32
  }
  func.func @transform_2(%arg0: i32) -> (i32, i32) {
    %c0_i32 = arith.constant 0 : i32
    %c0_i32_0 = arith.constant 0 : i32
    %c0_i32_1 = arith.constant 0 : i32
    return %c0_i32, %c0_i32_0 : i32, i32
  }
  func.func @transform_3(%arg0: i32) -> (i32, i32) {
    %c0_i32 = arith.constant 0 : i32
    %c0_i32_0 = arith.constant 0 : i32
    %c0_i32_1 = arith.constant 0 : i32
    return %c0_i32, %c0_i32_0 : i32, i32
  }
  func.func @transform_4(%arg0: i32) -> (i32, i32) {
    %c0_i32 = arith.constant 0 : i32
    %c0_i32_0 = arith.constant 0 : i32
    %c0_i32_1 = arith.constant 0 : i32
    return %c0_i32, %c0_i32_0 : i32, i32
  }
  func.func @transform_5(%arg0: i32) -> (i32, i32) {
    %c0_i32 = arith.constant 0 : i32
    %c0_i32_0 = arith.constant 0 : i32
    return %arg0, %c0_i32 : i32, i32
  }
  func.func @transform_6(%arg0: i32) -> (i32, i32) {
    %c0_i32 = arith.constant 0 : i32
    %c0_i32_0 = arith.constant 0 : i32
    return %arg0, %c0_i32 : i32, i32
  }
}

</mosaic_0001>

<llo_original>
// kernel: tpu_custom_call.1
$region0: #{tpu_custom_call.1}
  #allocation0 [shape = 'u32[]', space=smem, size = 0x4, offset = 0x4, fixed_abs, tag = 'smem constant byte address 0x4 - core index']
  #allocation1 [shape = 'u32[144,128]{1,0:T(1,128)}', space=vmem, size = 0x12000, scoped, tag = 'internal scratch']
  %s0 = inlined_call_operand.vmem [shape: f32[8,32], index: 0, kind: input, shape index: {}]
  %s1 = inlined_call_operand.vmem [shape: bf16[32,128], index: 1, kind: input, shape index: {}]
  %s2 = inlined_call_operand.vmem [shape: f32[1,128], index: 2, kind: input, shape index: {}]
  %s3 = inlined_call_operand.vmem [shape: bf16[128,32], index: 3, kind: input, shape index: {}]
  %s4 = inlined_call_operand.vmem [shape: f32[1,32], index: 4, kind: input, shape index: {}]
  %s5 = inlined_call_operand.hbm [shape: f32[8,16], index: 5, kind: output, shape index: {0}]
  %s6 = inlined_call_operand.hbm [shape: f32[8,16], index: 6, kind: output, shape index: {1}]
  %7 = xla_tuple %s5, %s6
  %s8 = sld [smem:[#allocation0]]
  $region38: #{tpu_custom_call.1} parent=0
    _
  %s10 = ssub.s32 1, %s8
  %s11 = scalar_select 0, %s10, %s8
  $region1: #{tpu_custom_call.1} parent=0
    #allocation2 [shape = 'u8[4096]{0}', space=vmem, size = 0x1000, scoped, tag = 'output window, operand 0, single buffered']
    #allocation3 [shape = 's32[1]{0}', space=sflag, size = 0x4, scoped, tag = 'scoped memory for tpu_custom_call.1']
    #allocation4 [shape = 'u8[4096]{0}', space=vmem, size = 0x1000, scoped, tag = 'output window, operand 1, single buffered']
    #allocation5 [shape = 's32[1]{0}', space=sflag, size = 0x4, scoped, tag = 'scoped memory for tpu_custom_call.1']
    %12 = vsyncpa [#allocation3], 0
    %13 = vsyncpa [#allocation5], 0
    // Predicated region
    $region2: #{tpu_custom_call.1} parent=1 // pred_check
      _
    $region3: #{tpu_custom_call.1} parent=1 // pred_check_branch
      %15 = sbr.rel (0) target = $region5
    $region4: #{tpu_custom_call.1} parent=1 // pred_region
      _
    $region5: #{tpu_custom_call.1} parent=1 // pred_fallthru
      _
    // Predicated region
    $region6: #{tpu_custom_call.1} parent=1 // pred_check
      _
    $region7: #{tpu_custom_call.1} parent=1 // pred_check_branch
      %17 = sbr.rel (0) target = $region9
    $region8: #{tpu_custom_call.1} parent=1 // pred_region
      _
    $region9: #{tpu_custom_call.1} parent=1 // pred_fallthru
      _
    // Predicated region
    $region10: #{tpu_custom_call.1} parent=1 // pred_check
      _
    $region11: #{tpu_custom_call.1} parent=1 // pred_check_branch
      %19 = sbr.rel (0) target = $region13
    $region12: #{tpu_custom_call.1} parent=1 // pred_region
      _
    $region13: #{tpu_custom_call.1} parent=1 // pred_fallthru
      _
    // Predicated region
    $region14: #{tpu_custom_call.1} parent=1 // pred_check
      _
    $region15: #{tpu_custom_call.1} parent=1 // pred_check_branch
      %21 = sbr.rel (0) target = $region17
    $region16: #{tpu_custom_call.1} parent=1 // pred_region
      _
    $region17: #{tpu_custom_call.1} parent=1 // pred_fallthru
      _
    // Predicated region
    $region18: #{tpu_custom_call.1} parent=1 // pred_check
      _
    $region19: #{tpu_custom_call.1} parent=1 // pred_check_branch
      %23 = sbr.rel (0) target = $region21
    $region20: #{tpu_custom_call.1} parent=1 // pred_region
      _
    $region21: #{tpu_custom_call.1} parent=1 // pred_fallthru
      _
    %v25 = vld [vmem:[%s0] sm:$0xff]
    %v26 = vpack.c.bf16 %v25, %v25
    %v27 = vld [vmem:[%s1] sm:$0xf]
    %v28 = vld [vmem:[%s1 + $0x4] sm:$0xf]
    %v29 = vld [vmem:[%s1 + $0x8] sm:$0xf]
    %v30 = vld [vmem:[%s1 + $0xc] sm:$0xf]
    %v31 = vld [vmem:[%s2] sm:$0x1]
    %v33 = vlaneseq
    %v34 = vshrl.u32 %v33, 7
    %v35 = vsub.s32 0, %v34
    %v36 = vrot.slane %v31, %v35
    %v42 = vunpack.c.l.b16 %v27
    %v43 = vunpack.c.l.b16 %v28
    %v44 = vunpack.c.l.b16 %v29
    %v45 = vunpack.c.l.b16 %v30
    %v46 = vpack.c.b16 %v43, %v42
    %v47 = vpack.c.b16 %v45, %v44
    %vm50 = vcmask 261120
    %v52 = vsel %vm50, %v26, 0
    %54 = vmatprep.subr.bf16.mxu0 0
    %55 = vmatpush1.bf16.msra.mxu0 0
    %56 = vmatprep.subr.bf16.mxu0 0
    %57 = vmatpush1.bf16.msra.mxu0 0
    %58 = vmatprep.subr.bf16.mxu0 0
    %59 = vmatpush1.bf16.msra.mxu0 0
    %60 = vmatprep.subr.bf16.mxu0 0
    %61 = vmatpush1.bf16.msra.mxu0 0
    %62 = vmatprep.subr.bf16.mxu0 0
    %63 = vmatpush1.bf16.msra.mxu0 0
    %64 = vmatprep.subr.bf16.mxu0 0
    %65 = vmatpush1.bf16.msra.mxu0 0
    %66 = vmatprep.subr.bf16.mxu0 0
    %67 = vmatpush1.bf16.msra.mxu0 %v47
    %68 = vmatprep.subr.bf16.mxu0 0
    %69 = vmatpush1.bf16.msra.mxu0 %v46
    %70 = vmatprep.subr.bf16.mxu0 0
    %71 = vmatpush2.bf16.msra.mxu0 0
    %72 = vmatprep.subr.bf16.mxu0 0
    %73 = vmatpush2.bf16.msra.mxu0 0
    %74 = vmatprep.subr.bf16.mxu0 0
    %75 = vmatpush2.bf16.msra.mxu0 0
    %76 = vmatprep.subr.bf16.mxu0 0
    %77 = vmatpush2.bf16.msra.mxu0 0
    %78 = vmatprep.subr.bf16.mxu0 0
    %79 = vmatpush2.bf16.msra.mxu0 0
    %80 = vmatprep.subr.bf16.mxu0 0
    %81 = vmatpush2.bf16.msra.mxu0 0
    %82 = vmatprep.subr.bf16.mxu0 0
    %83 = vmatpush2.bf16.msra.mxu0 0
    %84 = vmatprep.subr.bf16.mxu0 0
    %85 = vmatpush2.bf16.msra.mxu0 0
    %86 = vmatprep.mubr.bf16.mxu0 0
    %87 = vmatmul.mubr.bf16.gmra.mxu0 %v52
    %v88 = vpop.f32.mrf.mxu0
    %v89 = vadd.f32 %v36, %v88
    %v90 = vpop.f32.mrf.mxu0
    %v91 = vpop.f32.mrf.mxu0
    %v92 = vpop.f32.mrf.mxu0
    %93 = vdwg.mxu0
    %v94 = vmax.f32 %v89, 0.0
    %v95 = vpack.c.bf16 %v94, %v94
    %v96 = vld [vmem:[%s3] sm:$0xf]
    %v97 = vld [vmem:[%s3 + $0x4] sm:$0xf]
    %v98 = vld [vmem:[%s3 + $0x8] sm:$0xf]
    %v99 = vld [vmem:[%s3 + $0xc] sm:$0xf]
    %v100 = vld [vmem:[%s3 + $0x10] sm:$0xf]
    %v101 = vld [vmem:[%s3 + $0x14] sm:$0xf]
    %v102 = vld [vmem:[%s3 + $0x18] sm:$0xf]
    %v103 = vld [vmem:[%s3 + $0x1c] sm:$0xf]
    %v104 = vld [vmem:[%s3 + $0x20] sm:$0xf]
    %v105 = vld [vmem:[%s3 + $0x24] sm:$0xf]
    %v106 = vld [vmem:[%s3 + $0x28] sm:$0xf]
    %v107 = vld [vmem:[%s3 + $0x2c] sm:$0xf]
    %v108 = vld [vmem:[%s3 + $0x30] sm:$0xf]
    %v109 = vld [vmem:[%s3 + $0x34] sm:$0xf]
    %v110 = vld [vmem:[%s3 + $0x38] sm:$0xf]
    %v111 = vld [vmem:[%s3 + $0x3c] sm:$0xf]
    %v112 = vld [vmem:[%s4] sm:$0x1]
    %v114 = vlaneseq
    %v115 = vshrl.u32 %v114, 7
    %v116 = vsub.s32 0, %v115
    %v117 = vrot.slane %v112, %v116
    %v135 = vunpack.c.l.b16 %v96
    %v136 = vunpack.c.l.b16 %v97
    %v137 = vunpack.c.l.b16 %v98
    %v138 = vunpack.c.l.b16 %v99
    %v139 = vunpack.c.l.b16 %v100
    %v140 = vunpack.c.l.b16 %v101
    %v141 = vunpack.c.l.b16 %v102
    %v142 = vunpack.c.l.b16 %v103
    %v143 = vunpack.c.l.b16 %v104
    %v144 = vunpack.c.l.b16 %v105
    %v145 = vunpack.c.l.b16 %v106
    %v146 = vunpack.c.l.b16 %v107
    %v147 = vunpack.c.l.b16 %v108
    %v148 = vunpack.c.l.b16 %v109
    %v149 = vunpack.c.l.b16 %v110
    %v150 = vunpack.c.l.b16 %v111
    %v151 = vpack.c.b16 %v136, %v135
    %v152 = vpack.c.b16 %v138, %v137
    %v153 = vpack.c.b16 %v140, %v139
    %v154 = vpack.c.b16 %v142, %v141
    %v155 = vpack.c.b16 %v144, %v143
    %v156 = vpack.c.b16 %v146, %v145
    %v157 = vpack.c.b16 %v148, %v147
    %v158 = vpack.c.b16 %v150, %v149
    %167 = vmatprep.subr.bf16.mxu0 0
    %168 = vmatpush1.bf16.msra.mxu0 %v158
    %169 = vmatprep.subr.bf16.mxu0 0
    %170 = vmatpush1.bf16.msra.mxu0 %v157
    %171 = vmatprep.subr.bf16.mxu0 0
    %172 = vmatpush1.bf16.msra.mxu0 %v156
    %173 = vmatprep.subr.bf16.mxu0 0
    %174 = vmatpush1.bf16.msra.mxu0 %v155
    %175 = vmatprep.subr.bf16.mxu0 0
    %176 = vmatpush1.bf16.msra.mxu0 %v154
    %177 = vmatprep.subr.bf16.mxu0 0
    %178 = vmatpush1.bf16.msra.mxu0 %v153
    %179 = vmatprep.subr.bf16.mxu0 0
    %180 = vmatpush1.bf16.msra.mxu0 %v152
    %181 = vmatprep.subr.bf16.mxu0 0
    %182 = vmatpush1.bf16.msra.mxu0 %v151
    %183 = vmatprep.subr.bf16.mxu0 0
    %184 = vmatpush2.bf16.msra.mxu0 0
    %185 = vmatprep.subr.bf16.mxu0 0
    %186 = vmatpush2.bf16.msra.mxu0 0
    %187 = vmatprep.subr.bf16.mxu0 0
    %188 = vmatpush2.bf16.msra.mxu0 0
    %189 = vmatprep.subr.bf16.mxu0 0
    %190 = vmatpush2.bf16.msra.mxu0 0
    %191 = vmatprep.subr.bf16.mxu0 0
    %192 = vmatpush2.bf16.msra.mxu0 0
    %193 = vmatprep.subr.bf16.mxu0 0
    %194 = vmatpush2.bf16.msra.mxu0 0
    %195 = vmatprep.subr.bf16.mxu0 0
    %196 = vmatpush2.bf16.msra.mxu0 0
    %197 = vmatprep.subr.bf16.mxu0 0
    %198 = vmatpush2.bf16.msra.mxu0 0
    %199 = vmatprep.mubr.bf16.mxu0 0
    %200 = vmatmul.mubr.bf16.gmra.mxu0 %v95
    %v201 = vpop.f32.mrf.mxu0
    %v202 = vadd.f32 %v117, %v201
    %v203 = vpop.f32.mrf.mxu0
    %v204 = vpop.f32.mrf.mxu0
    %v205 = vpop.f32.mrf.mxu0
    %206 = vdwg.mxu0
    %v207 = vmax.f32 %v202, 0.0
    %vm208 = vcmask 130048
    %209 = vst.msk [vmem:[#allocation2] sm:$0xff] %vm208, %v207
    %211 = vrot.lane.b32.xlu0 %v207, 112
    %v212 = vpop.permute.xlu0 %211
    %214 = vst.msk [vmem:[#allocation4] sm:$0xff] %vm208, %v212
    // Predicated region
    $region22: #{tpu_custom_call.1} parent=1 // pred_check
      _
    $region23: #{tpu_custom_call.1} parent=1 // pred_check_branch
      %216 = sbr.rel (0) target = $region25
    $region24: #{tpu_custom_call.1} parent=1 // pred_region
      %s218 = ssub.s32 128, 128
      %219 = vsyncadd [#allocation3], %s218
      %s221 = sshll.u32 [#allocation2], 4
      %s222 = int_to_ptr.vmem [resolvable:$true] %s221
      %224 = dma.vmem_to_hbm [thread:$0]  %s222, 128, %s5, [#allocation3]
    $region25: #{tpu_custom_call.1} parent=1 // pred_fallthru
      _
    // Predicated region
    $region26: #{tpu_custom_call.1} parent=1 // pred_check
      _
    $region27: #{tpu_custom_call.1} parent=1 // pred_check_branch
      %226 = sbr.rel (0) target = $region29
    $region28: #{tpu_custom_call.1} parent=1 // pred_region
      %s228 = ssub.s32 128, 128
      %229 = vsyncadd [#allocation5], %s228
      %s231 = sshll.u32 [#allocation4], 4
      %s232 = int_to_ptr.vmem [resolvable:$true] %s231
      %234 = dma.vmem_to_hbm [thread:$0]  %s232, 128, %s6, [#allocation5]
    $region29: #{tpu_custom_call.1} parent=1 // pred_fallthru
      _
    // Predicated region
    $region30: #{tpu_custom_call.1} parent=1 // pred_check
      _
    $region31: #{tpu_custom_call.1} parent=1 // pred_check_branch
      %236 = sbr.rel (0) target = $region33
    $region32: #{tpu_custom_call.1} parent=1 // pred_region
      %237 = dma.done [#allocation3], 128
    $region33: #{tpu_custom_call.1} parent=1 // pred_fallthru
      _
    // Predicated region
    $region34: #{tpu_custom_call.1} parent=1 // pred_check
      _
    $region35: #{tpu_custom_call.1} parent=1 // pred_check_branch
      %239 = sbr.rel (0) target = $region37
    $region36: #{tpu_custom_call.1} parent=1 // pred_region
      %240 = dma.done [#allocation5], 128
    $region37: #{tpu_custom_call.1} parent=1 // pred_fallthru
      _
    %241 = vsyncpa [#allocation3], 1
    %242 = vsyncpa [#allocation5], 1

</llo_original>
